<compile_context>
chip_gen: v6e
topology: v6e:2x2x1
jax: 0.10.0
libtpu: 0.0.40
codegen_flags: <defaults>
</compile_context>

<pallas_src>
import numpy as np

import jax
import jax.numpy as jnp
from jax import lax
from jax.experimental import pallas as pl
from jax.experimental.pallas import tpu as pltpu

K = 4          # ConvTranspose2d kernel_size
STRIDE = 2
PAD = 1

_VMEM_BUDGET = 8 << 20   # per-step block budget (double-buffered), safe on v7x


def upsample_block_kernel(a_ref, w_ref, b_ref, o_ref):
    """One (batch element, output row band) per grid step.

    a_ref : (1, 9*Cin, TH*W)   im2col patches, K-dim = (ic, tap), lane-dense
    w_ref : (4*Cout, 9*Cin)    parity weights, rows = (phase, oc)
    b_ref : (4*Cout, 1)        bias tiled over the 4 phases
    o_ref : (1, 4*Cout, TH*W)  per-phase, channel-major, lane-dense output
    """
    y = jnp.dot(w_ref[...], a_ref[0], preferred_element_type=jnp.float32)
    o_ref[0] = jnp.maximum(y + b_ref[...], 0.0).astype(o_ref.dtype)


def _pick_th(n, cin, cout, h, w):
    """Largest row band (th) with lane-dense columns that fits the VMEM budget.

    Keeps >=2 grid steps when batch == 1 so both v7x TensorCores get work
    (v5e/v6e have a single TC and just take the biggest band)."""
    def step_bytes(t):
        tw = t * w
        return 2 * 4 * tw * (9 * cin + 4 * cout)   # in + out blocks, x2 buffers, f32

    divisors = [t for t in range(h, 0, -1) if h % t == 0]
    valid = [t for t in divisors if t == h or (t * w) % 128 == 0]
    fitting = [t for t in valid if step_bytes(t) <= _VMEM_BUDGET]
    pool = fitting if fitting else [valid[-1]]      # fall back to smallest valid
    if n == 1:
        banded = [t for t in pool if h // t >= 2]
        if banded:
            return banded[0]
    return pool[0]


def _parity_weight(weight, bias, cin, cout):
    """Build the (4*Cout, 9*Cin) parity-decomposed weight with one gather.

    Output pixel (2r+py, 2c+px, oc) = sum_{ry,rx,ic} x_pad[r+ry, c+rx, ic] *
    W[ic, oc, 3+py-2*ry, 3+px-2*rx] (taps outside [0, K) are zero)."""
    idx = np.zeros((4, 9), np.int32)
    msk = np.zeros((4, 9), np.float32)
    for py in range(2):
        for px in range(2):
            for ry in range(3):
                for rx in range(3):
                    ky = 3 + py - 2 * ry
                    kx = 3 + px - 2 * rx
                    if 0 <= ky < K and 0 <= kx < K:
                        idx[2 * py + px, ry * 3 + rx] = ky * K + kx
                        msk[2 * py + px, ry * 3 + rx] = 1.0

    wt = weight.astype(jnp.float32).reshape(cin, cout, K * K)
    w_g = wt[:, :, idx.reshape(-1)].reshape(cin, cout, 4, 9) * jnp.asarray(msk)
    # rows = (phase, oc); cols = (ic, tap)  -> (4*Cout, 9*Cin)
    w_mat = jnp.transpose(w_g, (2, 1, 0, 3)).reshape(4 * cout, 9 * cin)
    b_all = jnp.tile(bias.astype(jnp.float32), 4).reshape(4 * cout, 1)
    return w_mat, b_all


@jax.jit
def upsample_block(x_nchw, weight, bias):
    """x_nchw: (N, Cin, H, W); weight: (Cin, Cout, K, K) (PyTorch ConvTranspose2d
    layout); bias: (Cout,).  Returns relu(conv_transpose2d(x)) as (N, Cout, 2H, 2W)."""
    n, cin, h, w = x_nchw.shape
    cout = weight.shape[1]
    oh, ow = STRIDE * h, STRIDE * w

    w_mat, b_all = _parity_weight(weight, bias, cin, cout)

    # ---- wrapper-side im2col (fused XLA copy; no NHWC transpose needed) -----
    x_pad = jnp.pad(x_nchw.astype(jnp.float32), ((0, 0), (0, 0), (1, 1), (1, 1)))
    taps = [x_pad[:, :, ry:ry + h, rx:rx + w]
            for ry in range(3) for rx in range(3)]          # 9 x (n, cin, h, w)
    a = jnp.stack(taps, axis=2).reshape(n, 9 * cin, h * w)  # K-dim = (ic, tap)

    th = _pick_th(n, cin, cout, h, w)
    nb = h // th
    tw = th * w

    out = pl.pallas_call(
        upsample_block_kernel,
        out_shape=jax.ShapeDtypeStruct((n, 4 * cout, h * w), jnp.float32),
        grid_spec=pltpu.PrefetchScalarGridSpec(
            num_scalar_prefetch=0,
            grid=(n, nb),
            in_specs=[
                pl.BlockSpec((1, 9 * cin, tw), lambda i, j: (i, 0, j)),
                # Grid-invariant blocks: fetched once, not re-DMAed per step.
                pl.BlockSpec((4 * cout, 9 * cin), lambda i, j: (0, 0)),
                pl.BlockSpec((4 * cout, 1), lambda i, j: (0, 0)),
            ],
            out_specs=pl.BlockSpec((1, 4 * cout, tw), lambda i, j: (i, 0, j)),
        ),
        compiler_params=pltpu.CompilerParams(
            dimension_semantics=("parallel", "parallel"),
            vmem_limit_bytes=32 * 1024 * 1024),
    )(a, w_mat, b_all)

    # ---- un-interleave the 4 phases straight back to NCHW -------------------
    out = out.reshape(n, 2, 2, cout, h, w)            # (n, py, px, oc, h, w)
    out = jnp.transpose(out, (0, 3, 4, 1, 5, 2))      # (n, oc, h, py, w, px)
    return out.reshape(n, cout, oh, ow)


def _reference(x_nchw, weight, bias):
    """Pure-JAX reference for relu(ConvTranspose2d(k=4, s=2, p=1)(x))."""
    w_conv = jnp.transpose(weight[:, :, ::-1, ::-1], (1, 0, 2, 3))
    y = lax.conv_general_dilated(
        x_nchw.astype(jnp.float32), w_conv.astype(jnp.float32),
        window_strides=(1, 1),
        padding=((K - 1 - PAD, K - 1 - PAD), (K - 1 - PAD, K - 1 - PAD)),
        lhs_dilation=(STRIDE, STRIDE),
        dimension_numbers=("NCHW", "OIHW", "NCHW"))
    y = y + bias[None, :, None, None]
    return jnp.maximum(y, 0.0)


if __name__ == "__main__":
    batch, in_channels, out_channels, h, w = 2, 4, 8, 16, 16

    key = jax.random.PRNGKey(0)
    kx, kw, kb = jax.random.split(key, 3)
    x = jax.random.normal(kx, (batch, in_channels, h, w), jnp.float32)
    # PyTorch ConvTranspose2d weight layout: (in_channels, out_channels, kH, kW)
    weight = 0.1 * jax.random.normal(kw, (in_channels, out_channels, K, K), jnp.float32)
    bias = 0.1 * jax.random.normal(kb, (out_channels,), jnp.float32)

    out = upsample_block(x, weight, bias)
    out = jax.block_until_ready(out)

    ref = _reference(x, weight, bias)
    assert out.shape == (batch, out_channels, STRIDE * h, STRIDE * w), out.shape
    assert jnp.allclose(out, ref, atol=1e-4, rtol=1e-4), \
        float(jnp.max(jnp.abs(out - ref)))

    print("KERNEL_OK")
</pallas_src>

<mosaic_0001>
module attributes {stable_mosaic.version = 11 : i64} {
  func.func @upsample_block_kernel(%arg0: i32, %arg1: i32, %arg2: memref<1x36x256xf32, #tpu.memory_space<vmem>>, %arg3: memref<32x36xf32, #tpu.memory_space<vmem>>, %arg4: memref<32x1xf32, #tpu.memory_space<vmem>>, %arg5: memref<1x32x256xf32, #tpu.memory_space<vmem>>) attributes {dimension_semantics = [#tpu.dimension_semantics<parallel>, #tpu.dimension_semantics<parallel>], iteration_bounds = array<i64: 2, 1>, scalar_prefetch = 0 : i64, scratch_operands = 0 : i64, tpu.core_type = #tpu.core_type<tc>, window_params = [{transform_indices = @transform_0, window_bounds = array<i64: 1, 36, 256>}, {pipeline_mode = #tpu.pipeline_mode<synchronous>, transform_indices = @transform_1, window_bounds = array<i64: 32, 36>}, {pipeline_mode = #tpu.pipeline_mode<synchronous>, transform_indices = @transform_2, window_bounds = array<i64: 32, 1>}, {transform_indices = @transform_3, window_bounds = array<i64: 1, 32, 256>}]} {
    %c0 = arith.constant 0 : index
    %c0_0 = arith.constant 0 : index
    %0 = vector.load %arg3[%c0, %c0_0] : memref<32x36xf32, #tpu.memory_space<vmem>>, vector<32x36xf32>
    %c0_1 = arith.constant 0 : index
    %c0_2 = arith.constant 0 : index
    %c0_3 = arith.constant 0 : index
    %1 = vector.load %arg2[%c0_1, %c0_2, %c0_3] : memref<1x36x256xf32, #tpu.memory_space<vmem>>, vector<1x36x256xf32>
    %2 = vector.shape_cast %1 : vector<1x36x256xf32> to vector<36x256xf32>
    %cst = arith.constant dense<0.000000e+00> : vector<32x256xf32>
    %3 = tpu.matmul %0, %2, %cst {dimension_numbers = #tpu.dot_dimension_numbers<[1], [0], [0], [1], [0, 0, 1, 1], [], []>} : vector<32x36xf32>, vector<36x256xf32>, vector<32x256xf32> -> vector<32x256xf32>
    %c0_4 = arith.constant 0 : index
    %c0_5 = arith.constant 0 : index
    %4 = vector.load %arg4[%c0_4, %c0_5] : memref<32x1xf32, #tpu.memory_space<vmem>>, vector<32x1xf32>
    %5 = vector.broadcast %4 : vector<32x1xf32> to vector<32x256xf32>
    %6 = arith.addf %3, %5 : vector<32x256xf32>
    %cst_6 = arith.constant 0.000000e+00 : f32
    %7 = vector.broadcast %cst_6 : f32 to vector<32x256xf32>
    %8 = arith.maximumf %6, %7 : vector<32x256xf32>
    %c0_7 = arith.constant 0 : index
    %c0_8 = arith.constant 0 : index
    %c0_9 = arith.constant 0 : index
    %9 = vector.load %arg5[%c0_7, %c0_8, %c0_9] : memref<1x32x256xf32, #tpu.memory_space<vmem>>, vector<1x32x256xf32>
    %10 = vector.shape_cast %9 : vector<1x32x256xf32> to vector<32x256xf32>
    %11 = vector.shape_cast %8 : vector<32x256xf32> to vector<1x32x256xf32>
    tpu.vector_store %arg5[%c0_7, %c0_8, %c0_9], %11 {strides = array<i32>} : memref<1x32x256xf32, #tpu.memory_space<vmem>>, vector<1x32x256xf32>,
    return
  }
  func.func @transform_0(%arg0: i32, %arg1: i32) -> (i32, i32, i32) {
    %c0_i32 = arith.constant 0 : i32
    %c0_i32_0 = arith.constant 0 : i32
    return %arg0, %c0_i32, %arg1 : i32, i32, i32
  }
  func.func @transform_1(%arg0: i32, %arg1: i32) -> (i32, i32) {
    %c0_i32 = arith.constant 0 : i32
    %c0_i32_0 = arith.constant 0 : i32
    %c0_i32_1 = arith.constant 0 : i32
    return %c0_i32, %c0_i32_0 : i32, i32
  }
  func.func @transform_2(%arg0: i32, %arg1: i32) -> (i32, i32) {
    %c0_i32 = arith.constant 0 : i32
    %c0_i32_0 = arith.constant 0 : i32
    %c0_i32_1 = arith.constant 0 : i32
    return %c0_i32, %c0_i32_0 : i32, i32
  }
  func.func @transform_3(%arg0: i32, %arg1: i32) -> (i32, i32, i32) {
    %c0_i32 = arith.constant 0 : i32
    %c0_i32_0 = arith.constant 0 : i32
    return %arg0, %c0_i32, %arg1 : i32, i32, i32
  }
}

</mosaic_0001>

<llo_original>
// kernel: tile.8
$region0: #{tile.8}
  #allocation0 [shape = 's32[1]{0}', space=sflag, size = 0x4, scoped, tag = 'scoped memory for tile.8']
  %s0 = inlined_call_operand.vmem [shape: f32[8], index: 0, kind: input, shape index: {}]
  %s1 = inlined_call_operand.vmem [shape: f32[4,8], index: 1, kind: output, shape index: {}]
  // Predicated region
  $region2: #{tile.8} parent=0 // pred_check
    _
  $region3: #{tile.8} parent=0 // pred_check_branch
    %3 = sbr.rel (0) target = $region5
  $region4: #{tile.8} parent=0 // pred_region
    _
  $region5: #{tile.8} parent=0 // pred_fallthru
    _
  %v4 = vld [vmem:[%s0] ss:$0 sm:$0xff]
  %5 = vst [vmem:[%s1] sm:$0xf] %v4

// kernel: tile.0
$region0: #{tile.0}
  %s0 = inlined_call_operand.vmem [shape: f32[4,8], index: 0, kind: input, shape index: {}]
  %s1 = inlined_call_operand.vmem [shape: f32[32,1], index: 1, kind: output, shape index: {}]
  $region1: #{tile.0} parent=0
    #allocation0 [shape = 'u8[4096]{0}', space=vmem, size = 0x1000, scoped, tag = 'scoped mem for input reshape']
    %s3 = sshll.u32 1, 4
    %s4 = ssub.s32 %s3, 1
    %v5 = vld [vmem:[%s0] sm:%s4]
    %6 = vst [vmem:[#allocation0] sm:%s4] %v5
    %v7 = vld [vmem:[#allocation0] sm:$0xf]
    %vm8 = vcmask 7168
    %9 = vst.msk [vmem:[%s1] ss:$8 sm:$0xf] %vm8, %v7
    %v10 = vld [vmem:[#allocation0] sm:$0xf]
    %11 = vrot.lane.b32.xlu0 %v10, 127
    %v12 = vpop.permute.xlu0 %11
    %vm13 = vcmask 7168
    %s14 = scalar_lea.vmem %s1, 1
    %15 = vst.msk [vmem:[%s14] ss:$8 sm:$0xf] %vm13, %v12
    %v16 = vld [vmem:[#allocation0] sm:$0xf]
    %17 = vrot.lane.b32.xlu0 %v16, 126
    %v18 = vpop.permute.xlu0 %17
    %vm19 = vcmask 7168
    %s20 = scalar_lea.vmem %s1, 2
    %21 = vst.msk [vmem:[%s20] ss:$8 sm:$0xf] %vm19, %v18
    %v22 = vld [vmem:[#allocation0] sm:$0xf]
    %23 = vrot.lane.b32.xlu0 %v22, 125
    %v24 = vpop.permute.xlu0 %23
    %vm25 = vcmask 7168
    %s26 = scalar_lea.vmem %s1, 3
    %27 = vst.msk [vmem:[%s26] ss:$8 sm:$0xf] %vm25, %v24
    %v28 = vld [vmem:[#allocation0] sm:$0xf]
    %29 = vrot.lane.b32.xlu0 %v28, 124
    %v30 = vpop.permute.xlu0 %29
    %vm31 = vcmask 7168
    %s32 = scalar_lea.vmem %s1, 4
    %33 = vst.msk [vmem:[%s32] ss:$8 sm:$0xf] %vm31, %v30
    %v34 = vld [vmem:[#allocation0] sm:$0xf]
    %35 = vrot.lane.b32.xlu0 %v34, 123
    %v36 = vpop.permute.xlu0 %35
    %vm37 = vcmask 7168
    %s38 = scalar_lea.vmem %s1, 5
    %39 = vst.msk [vmem:[%s38] ss:$8 sm:$0xf] %vm37, %v36
    %v40 = vld [vmem:[#allocation0] sm:$0xf]
    %41 = vrot.lane.b32.xlu0 %v40, 122
    %v42 = vpop.permute.xlu0 %41
    %vm43 = vcmask 7168
    %s44 = scalar_lea.vmem %s1, 6
    %45 = vst.msk [vmem:[%s44] ss:$8 sm:$0xf] %vm43, %v42
    %v46 = vld [vmem:[#allocation0] sm:$0xf]
    %47 = vrot.lane.b32.xlu0 %v46, 121
    %v48 = vpop.permute.xlu0 %47
    %vm49 = vcmask 7168
    %s50 = scalar_lea.vmem %s1, 7
    %51 = vst.msk [vmem:[%s50] ss:$8 sm:$0xf] %vm49, %v48

// kernel: upsample_block.1
$region0: #{upsample_block.1}
  #allocation0 [shape = 'u32[]', space=smem, size = 0x4, offset = 0x4, fixed_abs, tag = 'smem constant byte address 0x4 - core index']
  #allocation1 [shape = 'u32[144,128]{1,0:T(1,128)}', space=vmem, size = 0x12000, scoped, tag = 'internal scratch']
  %s0 = inlined_call_operand.vmem [shape: f32[2,36,256], index: 0, kind: input, shape index: {}]
  %s1 = inlined_call_operand.vmem [shape: f32[32,36], index: 1, kind: input, shape index: {}]
  %s2 = inlined_call_operand.vmem [shape: f32[32,1], index: 2, kind: input, shape index: {}]
  %s3 = inlined_call_operand.vmem [shape: f32[2,32,256], index: 3, kind: output, shape index: {}]
  %s4 = sld [smem:[#allocation0]]
  $region45: #{upsample_block.1} parent=0
    _
  %s6 = ssub.s32 1, %s4
  %s7 = scalar_select 0, %s6, %s4
  loop: start=0, step=1, limit=4
  $region2: #{upsample_block.1} parent=0 // loop_pre_header
    _
  $region3: #{upsample_block.1} parent=0 // loop_header
    %s9 = sphi 0, %s13
    %p10 = scmp.ge.s32.totalorder %s9, 4
    %s16 = sphi 0, %s28
    %s17 = sphi 0, %s24
    %s18 = sphi 0, %s16
    %s19 = sphi 0, %s17
    %s20 = sphi 0, %s18
    %s21 = sphi 0, %s19
    %s33 = sphi 0, %s35
    %s36 = sphi 0, %s33
    %s37 = sphi 0, %s36
    %s53 = sphi 0, %s37
    %s57 = sphi 0, %s57
    %s59 = sphi 0, %s57
    %s60 = sphi 0, %s59
    %s74 = sphi 0, %s60
    %s78 = sphi 0, %s78
    %s80 = sphi 0, %s78
    %s81 = sphi 0, %s80
    %s95 = sphi 0, %s81
    %s103 = sphi 0, %s105
    %s106 = sphi 0, %s103
    %s107 = sphi 0, %s106
    %s123 = sphi 0, %s107
  $region4: #{upsample_block.1} parent=0 // loop_header_branch
    %12 = sbr.rel (%p10) target = $region8
  $region5: #{upsample_block.1} parent=0 // loop_body
    %s14 = ssub.s32 %s9, 1
    %s15 = ssub.s32 %s9, 2
    %s22 = sadd.s32 1, %s17
    %p23 = scmp.ge.s32.totalorder %s22, 1
    %s24 = scalar_select %p23, 0, %s22
    %s25 = sadd.s32 1, %s16
    %s26 = scalar_select %p23, %s25, %s16
    %p27 = scmp.ge.s32.totalorder %s26, 2
    %s28 = scalar_select %p27, 0, %s26
    %s29 = ssub.s32 %s16, %s28
    %s30 = ssub.s32 %s17, %s24
    %s31 = sor.u32 %s29, %s30
    %p32 = scmp.eq.s32.totalorder %s31, 0
    %s34 = sadd.s32 %s33, 1
    %s35 = scalar_select %p32, %s33, %s34
    %p38 = pneg %p32
    %p39 = scmp.eq.s32.totalorder %s9, 1
    %p40 = por %p38, %p39
    %p41 = scmp.ne.s32.totalorder %s33, %s36
    %p42 = scmp.eq.s32.totalorder %s9, 0
    %p43 = por %p41, %p42
    %p44 = scmp.ne.s32.totalorder %s33, %s36
    %p45 = scmp.eq.s32.totalorder %s14, 1
    %p46 = por %p44, %p45
    %p47 = scmp.ne.s32.totalorder %s36, %s37
    %p48 = scmp.eq.s32.totalorder %s14, 0
    %p49 = por %p47, %p48
    %p50 = scmp.ne.s32.totalorder %s36, %s37
    %p51 = scmp.eq.s32.totalorder %s15, 1
    %p52 = por %p50, %p51
    %p54 = scmp.ne.s32.totalorder %s37, %s53
    %p55 = scmp.eq.s32.totalorder %s15, 0
    %p56 = por %p54, %p55
    %s58 = sadd.s32 %s57, 1
    %p61 = scmp.eq.s32.totalorder %s9, 1
    %p62 = scmp.ne.s32.totalorder %s57, %s59
    %p63 = scmp.eq.s32.totalorder %s9, 0
    %p64 = por %p62, %p63
    %p65 = scmp.ne.s32.totalorder %s57, %s59
    %p66 = scmp.eq.s32.totalorder %s14, 1
    %p67 = por %p65, %p66
    %p68 = scmp.ne.s32.totalorder %s59, %s60
    %p69 = scmp.eq.s32.totalorder %s14, 0
    %p70 = por %p68, %p69
    %p71 = scmp.ne.s32.totalorder %s59, %s60
    %p72 = scmp.eq.s32.totalorder %s15, 1
    %p73 = por %p71, %p72
    %p75 = scmp.ne.s32.totalorder %s60, %s74
    %p76 = scmp.eq.s32.totalorder %s15, 0
    %p77 = por %p75, %p76
    %s79 = sadd.s32 %s78, 1
    %p82 = scmp.eq.s32.totalorder %s9, 1
    %p83 = scmp.ne.s32.totalorder %s78, %s80
    %p84 = scmp.eq.s32.totalorder %s9, 0
    %p85 = por %p83, %p84
    %p86 = scmp.ne.s32.totalorder %s78, %s80
    %p87 = scmp.eq.s32.totalorder %s14, 1
    %p88 = por %p86, %p87
    %p89 = scmp.ne.s32.totalorder %s80, %s81
    %p90 = scmp.eq.s32.totalorder %s14, 0
    %p91 = por %p89, %p90
    %p92 = scmp.ne.s32.totalorder %s80, %s81
    %p93 = scmp.eq.s32.totalorder %s15, 1
    %p94 = por %p92, %p93
    %p96 = scmp.ne.s32.totalorder %s81, %s95
    %p97 = scmp.eq.s32.totalorder %s15, 0
    %p98 = por %p96, %p97
    %s99 = ssub.s32 %s16, %s28
    %s100 = ssub.s32 %s17, %s24
    %s101 = sor.u32 %s99, %s100
    %p102 = scmp.eq.s32.totalorder %s101, 0
    %s104 = sadd.s32 %s103, 1
    %s105 = scalar_select %p102, %s103, %s104
    %p108 = pneg %p102
    %p109 = scmp.eq.s32.totalorder %s9, 1
    %p110 = por %p108, %p109
    %p111 = scmp.ne.s32.totalorder %s103, %s106
    %p112 = scmp.eq.s32.totalorder %s9, 0
    %p113 = por %p111, %p112
    %p114 = scmp.ne.s32.totalorder %s103, %s106
    %p115 = scmp.eq.s32.totalorder %s14, 1
    %p116 = por %p114, %p115
    %p117 = scmp.ne.s32.totalorder %s106, %s107
    %p118 = scmp.eq.s32.totalorder %s14, 0
    %p119 = por %p117, %p118
    %p120 = scmp.ne.s32.totalorder %s106, %s107
    %p121 = scmp.eq.s32.totalorder %s15, 1
    %p122 = por %p120, %p121
    %p124 = scmp.ne.s32.totalorder %s107, %s123
    %p125 = scmp.eq.s32.totalorder %s15, 0
    %p126 = por %p124, %p125
    %p127 = scmp.le.s32.totalorder 1, %s9
    %p128 = scmp.lt.s32.totalorder %s9, 3
    %p129 = pnand %p127, %p128
    %p130 = pneg %p129
    // Predicated region
    $region9: #{upsample_block.1} parent=5 // pred_check
      _
    $region10: #{upsample_block.1} parent=5 // pred_check_branch
      %132 = sbr.rel (%p129) target = $region12
    $region11: #{upsample_block.1} parent=5 // pred_region
      %s133 = ssub.s32 %s9, 1
      // Predicated region
      $region13: #{upsample_block.1} parent=11 // pred_check
        %p134 = pneg %p70
      $region14: #{upsample_block.1} parent=11 // pred_check_branch
        %136 = sbr.rel (%p134) target = $region16
      $region15: #{upsample_block.1} parent=11 // pred_region
        _
      $region16: #{upsample_block.1} parent=11 // pred_fallthru
        _
      // Predicated region
      $region17: #{upsample_block.1} parent=11 // pred_check
        %p137 = pneg %p91
      $region18: #{upsample_block.1} parent=11 // pred_check_branch
        %139 = sbr.rel (%p137) target = $region20
      $region19: #{upsample_block.1} parent=11 // pred_region
        _
      $region20: #{upsample_block.1} parent=11 // pred_fallthru
        _
    $region12: #{upsample_block.1} parent=5 // pred_fallthru
      _
    %p140 = scmp.lt.s32.totalorder %s9, 2
    // Predicated region
    $region21: #{upsample_block.1} parent=5 // pred_check
      %p141 = pneg %p140
    $region22: #{upsample_block.1} parent=5 // pred_check_branch
      %143 = sbr.rel (%p141) target = $region24
    $region23: #{upsample_block.1} parent=5 // pred_region
      // Predicated region
      $region25: #{upsample_block.1} parent=23 // pred_check
        %p144 = pneg %p43
      $region26: #{upsample_block.1} parent=23 // pred_check_branch
        %146 = sbr.rel (%p144) target = $region28
      $region27: #{upsample_block.1} parent=23 // pred_region
        %s147 = smul.u32 2, %s17
        %p148 = scmp.lt.s32.totalorder %s16, 1
        %s149 = scalar_select %p148, %s16, 1
        %p150 = scmp.lt.s32.totalorder %s147, 1
        %s151 = scalar_select %p150, %s147, 1
        %s152 = smul.addr %s149, 10
        %s153 = sadd.s32 %s151, %s152
        %s154 = smul.addr %s153, 8
        %s155 = scalar_lea.vmem %s0, %s154
        %s156 = smul.u32 2, %s17
      $region28: #{upsample_block.1} parent=23 // pred_fallthru
        _
    $region24: #{upsample_block.1} parent=5 // pred_fallthru
      _
    %p157 = scmp.le.s32.totalorder 1, %s9
    %p158 = scmp.lt.s32.totalorder %s9, 3
    %p159 = pnand %p157, %p158
    %p160 = pneg %p159
    // Predicated region
    $region29: #{upsample_block.1} parent=5 // pred_check
      _
    $region30: #{upsample_block.1} parent=5 // pred_check_branch
      %162 = sbr.rel (%p159) target = $region32
    $region31: #{upsample_block.1} parent=5 // pred_region
      %s163 = ssub.s32 %s9, 1
      %s164 = smul.u32 2, %s19
      %p165 = scmp.lt.s32.totalorder %s18, 1
      %s166 = scalar_select %p165, %s18, 1
      %p167 = scmp.lt.s32.totalorder %s164, 1
      %s168 = scalar_select %p167, %s164, 1
      %s169 = smul.addr %s166, 10
      %s170 = sadd.s32 %s168, %s169
      %s171 = smul.addr %s170, 8
      %s172 = scalar_lea.vmem %s0, %s171
      %p173 = pneg %p49
      %p174 = pneg %p46
      %p175 = pneg %p70
      %p176 = pneg %p67
      %p177 = pneg %p91
      %p178 = pneg %p88
      %p179 = pneg %p119
      %p180 = pneg %p116
      %s181 = smul.u32 2, %s19
      %p182 = scmp.lt.s32.totalorder %s18, 1
      %s183 = scalar_select %p182, %s18, 1
      %p184 = scmp.lt.s32.totalorder %s181, 1
      %s185 = scalar_select %p184, %s181, 1
      %s186 = smul.addr %s183, 8
      %s187 = sadd.s32 %s185, %s186
      %s188 = smul.addr %s187, 8
      %s189 = scalar_lea.vmem %s3, %s188
      %s190 = smul.u32 2, %s19
      %p191 = scmp.lt.s32.totalorder %s18, 1
      %s192 = scalar_select %p191, %s18, 1
      %p193 = scmp.lt.s32.totalorder %s190, 1
      %s194 = scalar_select %p193, %s190, 1
      %s195 = smul.addr %s192, 10
      %s196 = sadd.s32 %s194, %s195
      %s197 = smul.addr %s196, 8
      %s198 = scalar_lea.vmem %s0, %s197
      %s199 = smul.u32 2, %s19
      %s200 = smul.u32 2, %s19
      %p201 = scmp.lt.s32.totalorder %s18, 1
      %s202 = scalar_select %p201, %s18, 1
      %p203 = scmp.lt.s32.totalorder %s200, 1
      %s204 = scalar_select %p203, %s200, 1
      %s205 = smul.addr %s202, 8
      %s206 = sadd.s32 %s204, %s205
      %s207 = smul.addr %s206, 8
      %s208 = scalar_lea.vmem %s3, %s207
      %s209 = smul.u32 2, %s19
      %v210 = vld [vmem:[%s1] sm:$0xff]
      %v211 = vld [vmem:[%s1 + $0x8] sm:$0xff]
      %v212 = vld [vmem:[%s1 + $0x10] sm:$0xff]
      %v213 = vld [vmem:[%s1 + $0x18] sm:$0xff]
      %v214 = vld [vmem:[%s198] sm:$0xff]
      %v215 = vld [vmem:[%s198 + $0x8] sm:$0xff]
      %v216 = vld [vmem:[%s198 + $0x10] sm:$0xff]
      %v217 = vld [vmem:[%s198 + $0x18] sm:$0xff]
      %v218 = vld [vmem:[%s198 + $0x20] sm:$0xff]
      %v219 = vld [vmem:[%s198 + $0x28] sm:$0xff]
      %v220 = vld [vmem:[%s198 + $0x30] sm:$0xff]
      %v221 = vld [vmem:[%s198 + $0x38] sm:$0xff]
      %v222 = vld [vmem:[%s198 + $0x40] sm:$0xf]
      %v223 = vld [vmem:[%s198 + $0x48] sm:$0xf]
      %v224 = vld [vmem:[%s2] sm:$0xff]
      %v225 = vld [vmem:[%s2 + $0x8] sm:$0xff]
      %v226 = vld [vmem:[%s2 + $0x10] sm:$0xff]
      %v227 = vld [vmem:[%s2 + $0x18] sm:$0xff]
      %229 = vset.pattern.permute.xlu0 0
      %230 = vperm.xlu0 %229, %v224
      %v231 = vpop.permute.xlu0 %230
      %234 = vset.pattern.permute.xlu0 0
      %235 = vperm.xlu0 %234, %v225
      %v236 = vpop.permute.xlu0 %235
      %239 = vset.pattern.permute.xlu0 0
      %240 = vperm.xlu0 %239, %v226
      %v241 = vpop.permute.xlu0 %240
      %244 = vset.pattern.permute.xlu0 0
      %245 = vperm.xlu0 %244, %v227
      %v246 = vpop.permute.xlu0 %245
      %vm248 = vcmask 293888
      %v250 = vsel %vm248, %v210, 0
      %v253 = vsel %vm248, %v211, 0
      %v256 = vsel %vm248, %v212, 0
      %v259 = vsel %vm248, %v213, 0
      %vm261 = vcmask 1043456
      %v263 = vsel %vm261, %v222, 0
      %v266 = vsel %vm261, %v223, 0
      %268 = vmatprep.subr.mxu0 0.0
      %269 = vmatpush1.msra.mxu0 0.0
      %270 = vmatprep.subr.mxu0 0.0
      %271 = vmatpush1.msra.mxu0 0.0
      %272 = vmatprep.subr.mxu0 0.0
      %273 = vmatpush1.msra.mxu0 0.0
      %274 = vmatprep.subr.mxu0 0.0
      %275 = vmatpush1.msra.mxu0 0.0
      %276 = vmatprep.subr.mxu0 0.0
      %277 = vmatpush1.msra.mxu0 0.0
      %278 = vmatprep.subr.mxu0 0.0
      %279 = vmatpush1.msra.mxu0 0.0
      %280 = vmatprep.subr.mxu0 0.0
      %281 = vmatpush1.msra.mxu0 0.0
      %282 = vmatprep.subr.mxu0 0.0
      %283 = vmatpush1.msra.mxu0 0.0
      %284 = vmatprep.subr.mxu0 0.0
      %285 = vmatpush1.msra.mxu0 0.0
      %286 = vmatprep.subr.mxu0 0.0
      %287 = vmatpush1.msra.mxu0 0.0
      %288 = vmatprep.subr.mxu0 0.0
      %289 = vmatpush1.msra.mxu0 0.0
      %290 = vmatprep.subr.mxu0 %v266
      %291 = vmatpush1.msra.mxu0 %v263
      %292 = vmatprep.subr.mxu0 %v221
      %293 = vmatpush1.msra.mxu0 %v220
      %294 = vmatprep.subr.mxu0 %v219
      %295 = vmatpush1.msra.mxu0 %v218
      %296 = vmatprep.subr.mxu0 %v217
      %297 = vmatpush1.msra.mxu0 %v216
      %298 = vmatprep.subr.mxu0 %v215
      %299 = vmatpush1.msra.mxu0 %v214
      %300 = vmatprep.subr.mxu0 0.0
      %301 = vmatpush2.msra.mxu0 0.0
      %302 = vmatprep.subr.mxu0 0.0
      %303 = vmatpush2.msra.mxu0 0.0
      %304 = vmatprep.subr.mxu0 0.0
      %305 = vmatpush2.msra.mxu0 0.0
      %306 = vmatprep.subr.mxu0 0.0
      %307 = vmatpush2.msra.mxu0 0.0
      %308 = vmatprep.subr.mxu0 0.0
      %309 = vmatpush2.msra.mxu0 0.0
      %310 = vmatprep.subr.mxu0 0.0
      %311 = vmatpush2.msra.mxu0 0.0
      %312 = vmatprep.subr.mxu0 0.0
      %313 = vmatpush2.msra.mxu0 0.0
      %314 = vmatprep.subr.mxu0 0.0
      %315 = vmatpush2.msra.mxu0 0.0
      %316 = vmatprep.subr.mxu0 0.0
      %317 = vmatpush2.msra.mxu0 0.0
      %318 = vmatprep.subr.mxu0 0.0
      %319 = vmatpush2.msra.mxu0 0.0
      %320 = vmatprep.subr.mxu0 0.0
      %321 = vmatpush2.msra.mxu0 0.0
      %322 = vmatprep.subr.mxu0 0.0
      %323 = vmatpush2.msra.mxu0 0.0
      %324 = vmatprep.subr.mxu0 0.0
      %325 = vmatpush2.msra.mxu0 0.0
      %326 = vmatprep.subr.mxu0 0.0
      %327 = vmatpush2.msra.mxu0 0.0
      %328 = vmatprep.subr.mxu0 0.0
      %329 = vmatpush2.msra.mxu0 0.0
      %330 = vmatprep.subr.mxu0 0.0
      %331 = vmatpush2.msra.mxu0 0.0
      %332 = vmatprep.mubr.f32.mxu0 0.0
      %333 = vmatmul.mubr.f32.gmra.mxu0 %v250
      %v334 = vpop.f32.mrf.mxu0
      %v335 = vadd.f32 %v231, %v334
      %v336 = vpop.f32.mrf.mxu0
      %v337 = vadd.f32 %v231, %v336
      %338 = vmatprep.mubr.f32.mxu0 0.0
      %339 = vmatmul.mubr.f32.gmra.mxu0 %v253
      %v340 = vpop.f32.mrf.mxu0
      %v341 = vadd.f32 %v236, %v340
      %v342 = vpop.f32.mrf.mxu0
      %v343 = vadd.f32 %v236, %v342
      %344 = vmatprep.mubr.f32.mxu0 0.0
      %345 = vmatmul.mubr.f32.gmra.mxu0 %v256
      %v346 = vpop.f32.mrf.mxu0
      %v347 = vadd.f32 %v241, %v346
      %v348 = vpop.f32.mrf.mxu0
      %v349 = vadd.f32 %v241, %v348
      %350 = vmatprep.mubr.f32.mxu0 0.0
      %351 = vmatmul.mubr.f32.gmra.mxu0 %v259
      %v352 = vpop.f32.mrf.mxu0
      %v353 = vadd.f32 %v246, %v352
      %v354 = vpop.f32.mrf.mxu0
      %v355 = vadd.f32 %v246, %v354
      %356 = vdwg.mxu0
      %v357 = vmax.f32 %v335, 0.0
      %v358 = vmax.f32 %v337, 0.0
      %v359 = vmax.f32 %v341, 0.0
      %v360 = vmax.f32 %v343, 0.0
      %v361 = vmax.f32 %v347, 0.0
      %v362 = vmax.f32 %v349, 0.0
      %v363 = vmax.f32 %v353, 0.0
      %v364 = vmax.f32 %v355, 0.0
      %365 = vst [vmem:[%s208] sm:$0xff] %v357
      %366 = vst [vmem:[%s208 + $0x8] sm:$0xff] %v358
      %367 = vst [vmem:[%s208 + $0x10] sm:$0xff] %v359
      %368 = vst [vmem:[%s208 + $0x18] sm:$0xff] %v360
      %369 = vst [vmem:[%s208 + $0x20] sm:$0xff] %v361
      %370 = vst [vmem:[%s208 + $0x28] sm:$0xff] %v362
      %371 = vst [vmem:[%s208 + $0x30] sm:$0xff] %v363
      %372 = vst [vmem:[%s208 + $0x38] sm:$0xff] %v364
      %s373 = smul.u32 2, %s19
      %p374 = scmp.lt.s32.totalorder %s18, 1
      %s375 = scalar_select %p374, %s18, 1
      %p376 = scmp.lt.s32.totalorder %s373, 1
      %s377 = scalar_select %p376, %s373, 1
      %s378 = smul.addr %s375, 8
      %s379 = sadd.s32 %s377, %s378
      %s380 = smul.addr %s379, 8
      %s381 = scalar_lea.vmem %s3, %s380
      // Predicated region
      $region33: #{upsample_block.1} parent=31 // pred_check
        %p382 = pneg %p116
      $region34: #{upsample_block.1} parent=31 // pred_check_branch
        %384 = sbr.rel (%p382) target = $region36
      $region35: #{upsample_block.1} parent=31 // pred_region
        %s385 = smul.u32 2, %s19
      $region36: #{upsample_block.1} parent=31 // pred_fallthru
        _
    $region32: #{upsample_block.1} parent=5 // pred_fallthru
      _
    %p386 = scmp.le.s32.totalorder 2, %s9
    // Predicated region
    $region37: #{upsample_block.1} parent=5 // pred_check
      %p387 = pneg %p386
    $region38: #{upsample_block.1} parent=5 // pred_check_branch
      %389 = sbr.rel (%p387) target = $region40
    $region39: #{upsample_block.1} parent=5 // pred_region
      %s390 = ssub.s32 %s9, 2
      // Predicated region
      $region41: #{upsample_block.1} parent=39 // pred_check
        %p391 = pneg %p122
      $region42: #{upsample_block.1} parent=39 // pred_check_branch
        %393 = sbr.rel (%p391) target = $region44
      $region43: #{upsample_block.1} parent=39 // pred_region
        %s394 = smul.u32 2, %s21
        %p395 = scmp.lt.s32.totalorder %s20, 1
        %s396 = scalar_select %p395, %s20, 1
        %p397 = scmp.lt.s32.totalorder %s394, 1
        %s398 = scalar_select %p397, %s394, 1
        %s399 = smul.addr %s396, 8
        %s400 = sadd.s32 %s398, %s399
        %s401 = smul.addr %s400, 8
        %s402 = scalar_lea.vmem %s3, %s401
      $region44: #{upsample_block.1} parent=39 // pred_fallthru
        _
    $region40: #{upsample_block.1} parent=5 // pred_fallthru
      _
  $region6: #{upsample_block.1} parent=0 // loop_footer
    %s13 = sadd.s32 1, %s9
  $region7: #{upsample_block.1} parent=0 // loop_footer_branch
    %8 = sbr.rel target = $region3
  $region8: #{upsample_block.1} parent=0 // loop_exit
    _

</llo_original>
